<compile_context>
chip_gen: v5e
topology: v5e:2x2
jax: 0.10.0
libtpu: 0.0.40
codegen_flags: <defaults>
</compile_context>

<pallas_src>
import functools

import jax
import jax.numpy as jnp
from jax.experimental import pallas as pl
from jax.experimental.pallas import tpu as pltpu

LANE = 128           # TPU lane width; hid and class dims are padded to this
KPAD = 2 * LANE      # K extent of every packed weight slab ([W_l ; W_r])


# ----------------------------- Pallas kernel ------------------------------ #
def _sage_kernel(x_ref, a_ref, w_ref, b_ref, out_ref):
    nfeat = x_ref.shape[1]
    num_conv = w_ref.shape[0] - 2          # slabs: [pre, conv_0..conv_{L-1}, post]

    # pre: Linear(nfeat, nhid) -> lane-padded [N, 128]; pad lanes are exactly 0.
    h = jnp.dot(x_ref[...], w_ref[0, :nfeat, :],
                preferred_element_type=jnp.float32) + b_ref[0]

    # Row-normalized (mean) adjacency, precomputed in f32 off the hot path.
    a = a_ref[...]                          # [N, N]

    # (nlayer - 1) SAGEConv layers, statically unrolled.
    for l in range(num_conv):
        # mean aggregation over incoming edges (single f32 matmul, no rescale)
        agg = jnp.dot(a, h, preferred_element_type=jnp.float32)
        # fused update: [agg | h] @ [W_l ; W_r] + b_l  (whole-vreg concat, K=256)
        hcat = jnp.concatenate([agg, h], axis=1)          # [N, 256]
        h = jnp.maximum(
            jnp.dot(hcat, w_ref[1 + l], preferred_element_type=jnp.float32)
            + b_ref[1 + l],
            0.0)                                           # ReLU; dropout(eval) = id

    # post: Linear(nhid, classes padded to 128); pad cols have W=0, b=-1e30.
    logits = jnp.dot(h, w_ref[num_conv + 1, :LANE, :],
                     preferred_element_type=jnp.float32) + b_ref[num_conv + 1]

    # log_softmax over the class axis (pad classes contribute exp(-huge) == 0)
    m = jnp.max(logits, axis=1, keepdims=True)
    z = logits - m
    lse = jnp.log(jnp.sum(jnp.exp(z), axis=1, keepdims=True))
    out_ref[...] = z - lse                                 # lane-dense [N, 128]


# ----------------------- one-time graph preprocessing ---------------------- #
def precompute_graph(edge_index, n):
    """Build the row-normalized (mean) adjacency once, off the hot path."""
    src, dst = edge_index[0], edge_index[1]
    counts = jnp.zeros((n, n), jnp.float32).at[dst, src].add(1.0)
    deg = jnp.sum(counts, axis=1, keepdims=True)
    # isolated nodes -> row of zeros -> agg = 0 (matches scatter-mean semantics)
    return counts / jnp.maximum(deg, 1.0)   # f32, exact vs the reference


# ---------------------- one-time parameter repacking ----------------------- #
def prepare_params(raw):
    """Pack/pad all weights into one [L+2, 256, 128] slab and all biases into
    one [L+2, 1, 128] slab (done once, not per forward)."""
    nfeat, nhid = raw["w_pre"].shape
    nclass = raw["w_post"].shape[1]
    convs = raw["convs"]
    L = len(convs)
    assert nhid <= LANE and nclass <= LANE and nfeat <= KPAD

    w_all = jnp.zeros((L + 2, KPAD, LANE), jnp.float32)
    b_all = jnp.zeros((L + 2, 1, LANE), jnp.float32)

    # pre: rows 0:nfeat, cols 0:nhid
    w_all = w_all.at[0, :nfeat, :nhid].set(raw["w_pre"])
    b_all = b_all.at[0, :, :nhid].set(raw["b_pre"])

    # convs: W_l at K-offset 0, W_r at K-offset LANE (matches [agg | h] concat)
    for l, (wl, bl, wr) in enumerate(convs):
        w_all = w_all.at[1 + l, :nhid, :nhid].set(wl)
        w_all = w_all.at[1 + l, LANE:LANE + nhid, :nhid].set(wr)
        b_all = b_all.at[1 + l, :, :nhid].set(bl)

    # post: rows 0:nhid, cols 0:nclass; pad classes get -1e30 bias (f32 only!)
    w_all = w_all.at[L + 1, :nhid, :nclass].set(raw["w_post"])
    b_all = b_all.at[L + 1].set(jnp.full((1, LANE), -1e30, jnp.float32))
    b_all = b_all.at[L + 1, :, :nclass].set(raw["b_post"])

    return {"w_all": w_all, "b_all": b_all}


# ------------------------------ JAX wrapper -------------------------------- #
@jax.jit
def sage_node_clf_forward(x, adj_norm, w_all, b_all):
    """x: [N, nfeat] f32, adj_norm: [N, N] f32 (row-normalized),
    w_all: [L+2, 256, 128] f32, b_all: [L+2, 1, 128] f32.
    Returns padded [N, 128] log-probs (pad classes ~ -1e30); consumers slice
    [:, :nclass] only if they need the exact class count."""
    n = x.shape[0]
    vmem = pl.BlockSpec(memory_space=pltpu.MemorySpace.VMEM)
    return pl.pallas_call(
        _sage_kernel,
        out_shape=jax.ShapeDtypeStruct((n, LANE), jnp.float32),
        in_specs=[vmem] * 4,
        out_specs=vmem,
    )(x, adj_norm, w_all, b_all)


# ------------------------- pure-JAX reference ------------------------------ #
def sage_node_clf_ref(x, edge_index, raw):
    n = x.shape[0]
    src, dst = edge_index[0], edge_index[1]
    adj = jnp.zeros((n, n), jnp.float32).at[dst, src].add(1.0)
    adj = adj / jnp.maximum(jnp.sum(adj, axis=1, keepdims=True), 1.0)

    h = x @ raw["w_pre"] + raw["b_pre"]
    for (wl, bl, wr) in raw["convs"]:
        agg = adj @ h
        h = jnp.maximum(agg @ wl + bl + h @ wr, 0.0)
    logits = h @ raw["w_post"] + raw["b_post"]
    return jax.nn.log_softmax(logits, axis=1)


# --------------------------------- main ------------------------------------ #
if __name__ == "__main__":
    # Small, module-consistent shapes.
    N, E = 64, 256          # nodes, edges
    nfeat, nhid, nclass = 16, 32, 8
    nlayer = 3              # -> 2 SAGEConv layers
    num_conv = nlayer - 1

    key = jax.random.PRNGKey(0)
    ks = jax.random.split(key, 13)

    x = jax.random.normal(ks[0], (N, nfeat), jnp.float32)
    edge_index = jnp.stack([
        jax.random.randint(ks[1], (E,), 0, N, jnp.int32),
        jax.random.randint(ks[2], (E,), 0, N, jnp.int32),
    ], axis=0)

    # Raw (PyTorch-layout) parameters; weights stored as [in, out].
    raw_params = {
        "w_pre": 0.1 * jax.random.normal(ks[3], (nfeat, nhid), jnp.float32),
        "b_pre": 0.1 * jax.random.normal(ks[4], (1, nhid), jnp.float32),
        "convs": [
            (0.1 * jax.random.normal(ks[5 + 3 * l + 0], (nhid, nhid), jnp.float32),
             0.1 * jax.random.normal(ks[5 + 3 * l + 1], (1, nhid), jnp.float32),
             0.1 * jax.random.normal(ks[5 + 3 * l + 2], (nhid, nhid), jnp.float32))
            for l in range(num_conv)
        ],
        "w_post": 0.1 * jax.random.normal(ks[11], (nhid, nclass), jnp.float32),
        "b_post": 0.1 * jax.random.normal(ks[12], (1, nclass), jnp.float32),
    }

    # One-time preprocessing (off the per-forward hot path).
    adj_norm = precompute_graph(edge_index, N)
    packed = prepare_params(raw_params)

    out_pad = sage_node_clf_forward(x, adj_norm, packed["w_all"], packed["b_all"])
    out_pad = jax.block_until_ready(out_pad)

    out = out_pad[:, :nclass]       # slice only for the reference comparison
    ref = sage_node_clf_ref(x, edge_index, raw_params)
    assert out.shape == (N, nclass)
    assert jnp.max(jnp.abs(out - ref)) < 1e-4, "mismatch vs pure-JAX reference"

    print("KERNEL_OK")
</pallas_src>

<mosaic_0001>
module attributes {stable_mosaic.version = 11 : i64} {
  func.func @_sage_kernel(%arg0: memref<64x16xf32, #tpu.memory_space<vmem>>, %arg1: memref<64x64xf32, #tpu.memory_space<vmem>>, %arg2: memref<4x256x128xf32, #tpu.memory_space<vmem>>, %arg3: memref<4x1x128xf32, #tpu.memory_space<vmem>>, %arg4: memref<64x128xf32, #tpu.memory_space<vmem>>) attributes {dimension_semantics = [], scalar_prefetch = 0 : i64, scratch_operands = 0 : i64, tpu.core_type = #tpu.core_type<tc>} {
    %c0 = arith.constant 0 : index
    %c0_0 = arith.constant 0 : index
    %0 = vector.load %arg0[%c0, %c0_0] : memref<64x16xf32, #tpu.memory_space<vmem>>, vector<64x16xf32>
    %c0_1 = arith.constant 0 : index
    %c0_2 = arith.constant 0 : index
    %c0_3 = arith.constant 0 : index
    %1 = vector.load %arg2[%c0_1, %c0_2, %c0_3] : memref<4x256x128xf32, #tpu.memory_space<vmem>>, vector<1x16x128xf32>
    %2 = vector.shape_cast %1 : vector<1x16x128xf32> to vector<16x128xf32>
    %cst = arith.constant dense<0.000000e+00> : vector<64x128xf32>
    %3 = tpu.matmul %0, %2, %cst {dimension_numbers = #tpu.dot_dimension_numbers<[1], [0], [0], [1], [0, 0, 1, 1], [], []>} : vector<64x16xf32>, vector<16x128xf32>, vector<64x128xf32> -> vector<64x128xf32>
    %c0_4 = arith.constant 0 : index
    %c0_5 = arith.constant 0 : index
    %c0_6 = arith.constant 0 : index
    %4 = vector.load %arg3[%c0_4, %c0_5, %c0_6] : memref<4x1x128xf32, #tpu.memory_space<vmem>>, vector<1x1x128xf32>
    %5 = vector.shape_cast %4 : vector<1x1x128xf32> to vector<1x128xf32>
    %6 = vector.broadcast %5 : vector<1x128xf32> to vector<64x128xf32>
    %7 = arith.addf %3, %6 : vector<64x128xf32>
    %c0_7 = arith.constant 0 : index
    %c0_8 = arith.constant 0 : index
    %8 = vector.load %arg1[%c0_7, %c0_8] : memref<64x64xf32, #tpu.memory_space<vmem>>, vector<64x64xf32>
    %cst_9 = arith.constant dense<0.000000e+00> : vector<64x128xf32>
    %9 = tpu.matmul %8, %7, %cst_9 {dimension_numbers = #tpu.dot_dimension_numbers<[1], [0], [0], [1], [0, 0, 1, 1], [], []>} : vector<64x64xf32>, vector<64x128xf32>, vector<64x128xf32> -> vector<64x128xf32>
    %10 = tpu.concatenate %9, %7 in 1 : vector<64x128xf32>, vector<64x128xf32> -> vector<64x256xf32>
    %c1 = arith.constant 1 : index
    %c0_10 = arith.constant 0 : index
    %c0_11 = arith.constant 0 : index
    %11 = vector.load %arg2[%c1, %c0_10, %c0_11] : memref<4x256x128xf32, #tpu.memory_space<vmem>>, vector<1x256x128xf32>
    %12 = vector.shape_cast %11 : vector<1x256x128xf32> to vector<256x128xf32>
    %cst_12 = arith.constant dense<0.000000e+00> : vector<64x128xf32>
    %13 = tpu.matmul %10, %12, %cst_12 {dimension_numbers = #tpu.dot_dimension_numbers<[1], [0], [0], [1], [0, 0, 1, 1], [], []>} : vector<64x256xf32>, vector<256x128xf32>, vector<64x128xf32> -> vector<64x128xf32>
    %c1_13 = arith.constant 1 : index
    %c0_14 = arith.constant 0 : index
    %c0_15 = arith.constant 0 : index
    %14 = vector.load %arg3[%c1_13, %c0_14, %c0_15] : memref<4x1x128xf32, #tpu.memory_space<vmem>>, vector<1x1x128xf32>
    %15 = vector.shape_cast %14 : vector<1x1x128xf32> to vector<1x128xf32>
    %16 = vector.broadcast %15 : vector<1x128xf32> to vector<64x128xf32>
    %17 = arith.addf %13, %16 : vector<64x128xf32>
    %cst_16 = arith.constant 0.000000e+00 : f32
    %18 = vector.broadcast %cst_16 : f32 to vector<64x128xf32>
    %19 = arith.maximumf %17, %18 : vector<64x128xf32>
    %cst_17 = arith.constant dense<0.000000e+00> : vector<64x128xf32>
    %20 = tpu.matmul %8, %19, %cst_17 {dimension_numbers = #tpu.dot_dimension_numbers<[1], [0], [0], [1], [0, 0, 1, 1], [], []>} : vector<64x64xf32>, vector<64x128xf32>, vector<64x128xf32> -> vector<64x128xf32>
    %21 = tpu.concatenate %20, %19 in 1 : vector<64x128xf32>, vector<64x128xf32> -> vector<64x256xf32>
    %c2 = arith.constant 2 : index
    %c0_18 = arith.constant 0 : index
    %c0_19 = arith.constant 0 : index
    %22 = vector.load %arg2[%c2, %c0_18, %c0_19] : memref<4x256x128xf32, #tpu.memory_space<vmem>>, vector<1x256x128xf32>
    %23 = vector.shape_cast %22 : vector<1x256x128xf32> to vector<256x128xf32>
    %cst_20 = arith.constant dense<0.000000e+00> : vector<64x128xf32>
    %24 = tpu.matmul %21, %23, %cst_20 {dimension_numbers = #tpu.dot_dimension_numbers<[1], [0], [0], [1], [0, 0, 1, 1], [], []>} : vector<64x256xf32>, vector<256x128xf32>, vector<64x128xf32> -> vector<64x128xf32>
    %c2_21 = arith.constant 2 : index
    %c0_22 = arith.constant 0 : index
    %c0_23 = arith.constant 0 : index
    %25 = vector.load %arg3[%c2_21, %c0_22, %c0_23] : memref<4x1x128xf32, #tpu.memory_space<vmem>>, vector<1x1x128xf32>
    %26 = vector.shape_cast %25 : vector<1x1x128xf32> to vector<1x128xf32>
    %27 = vector.broadcast %26 : vector<1x128xf32> to vector<64x128xf32>
    %28 = arith.addf %24, %27 : vector<64x128xf32>
    %cst_24 = arith.constant 0.000000e+00 : f32
    %29 = vector.broadcast %cst_24 : f32 to vector<64x128xf32>
    %30 = arith.maximumf %28, %29 : vector<64x128xf32>
    %c3 = arith.constant 3 : index
    %c0_25 = arith.constant 0 : index
    %c0_26 = arith.constant 0 : index
    %31 = vector.load %arg2[%c3, %c0_25, %c0_26] : memref<4x256x128xf32, #tpu.memory_space<vmem>>, vector<1x128x128xf32>
    %32 = vector.shape_cast %31 : vector<1x128x128xf32> to vector<128x128xf32>
    %cst_27 = arith.constant dense<0.000000e+00> : vector<64x128xf32>
    %33 = tpu.matmul %30, %32, %cst_27 {dimension_numbers = #tpu.dot_dimension_numbers<[1], [0], [0], [1], [0, 0, 1, 1], [], []>} : vector<64x128xf32>, vector<128x128xf32>, vector<64x128xf32> -> vector<64x128xf32>
    %c3_28 = arith.constant 3 : index
    %c0_29 = arith.constant 0 : index
    %c0_30 = arith.constant 0 : index
    %34 = vector.load %arg3[%c3_28, %c0_29, %c0_30] : memref<4x1x128xf32, #tpu.memory_space<vmem>>, vector<1x1x128xf32>
    %35 = vector.shape_cast %34 : vector<1x1x128xf32> to vector<1x128xf32>
    %36 = vector.broadcast %35 : vector<1x128xf32> to vector<64x128xf32>
    %37 = arith.addf %33, %36 : vector<64x128xf32>
    %cst_31 = arith.constant dense<0xFF800000> : vector<64xf32>
    %38 = vector.multi_reduction <maximumf>, %37, %cst_31 [1] : vector<64x128xf32> to vector<64xf32>
    %39 = vector.shape_cast %38 : vector<64xf32> to vector<64x1xf32>
    %40 = vector.broadcast %39 : vector<64x1xf32> to vector<64x128xf32>
    %41 = arith.subf %37, %40 : vector<64x128xf32>
    %42 = math.exp %41 : vector<64x128xf32>
    %cst_32 = arith.constant dense<0.000000e+00> : vector<64xf32>
    %43 = vector.multi_reduction <add>, %42, %cst_32 [1] : vector<64x128xf32> to vector<64xf32>
    %44 = vector.shape_cast %43 : vector<64xf32> to vector<64x1xf32>
    %45 = math.log %44 : vector<64x1xf32>
    %46 = vector.broadcast %45 : vector<64x1xf32> to vector<64x128xf32>
    %47 = arith.subf %41, %46 : vector<64x128xf32>
    %c0_33 = arith.constant 0 : index
    %c0_34 = arith.constant 0 : index
    %48 = vector.load %arg4[%c0_33, %c0_34] : memref<64x128xf32, #tpu.memory_space<vmem>>, vector<64x128xf32>
    tpu.vector_store %arg4[%c0_33, %c0_34], %47 {strides = array<i32>} : memref<64x128xf32, #tpu.memory_space<vmem>>, vector<64x128xf32>,
    return
  }
}

</mosaic_0001>

<llo_original>
// kernel: sage_node_clf_forward.1
$region0: #{sage_node_clf_forward.1}
  #allocation0 [shape = 'u32[]', space=smem, size = 0x4, offset = 0x4, fixed_abs, tag = 'smem constant byte address 0x4 - core index']
  #allocation1 [shape = 'u32[72,128]{1,0:T(1,128)}', space=vmem, size = 0x9000, scoped, tag = 'internal scratch']
  %s0 = inlined_call_operand.vmem [shape: f32[64,16], index: 0, kind: input, shape index: {}]
  %s1 = inlined_call_operand.vmem [shape: f32[64,64], index: 1, kind: input, shape index: {}]
  %s2 = inlined_call_operand.hbm [shape: f32[4,256,128], index: 2, kind: input, shape index: {}]
  %s3 = inlined_call_operand.vmem [shape: f32[4,1,128], index: 3, kind: input, shape index: {}]
  %s4 = inlined_call_operand.hbm [shape: f32[64,128], index: 4, kind: output, shape index: {}]
  %s5 = sld [smem:[#allocation0]]
  $region30: #{sage_node_clf_forward.1} parent=0
    _
  %s7 = ssub.s32 1, %s5
  %s8 = scalar_select 0, %s7, %s5
  $region1: #{sage_node_clf_forward.1} parent=0
    #allocation2 [shape = 'u8[524288]{0}', space=vmem, size = 0x80000, scoped, tag = 'input window, operand 2, single buffered']
    #allocation3 [shape = 's32[1]{0}', space=sflag, size = 0x4, scoped, tag = 'scoped memory for sage_node_clf_forward.1']
    #allocation4 [shape = 's32[1]{0}', space=sflag, size = 0x4, scoped, tag = 'scoped memory for sage_node_clf_forward.1']
    #allocation5 [shape = 'u8[32768]{0}', space=vmem, size = 0x8000, scoped, tag = 'output window, operand 0, single buffered']
    %9 = vsyncpa [#allocation3], 0
    %10 = vsyncpa [#allocation4], 0
    // Predicated region
    $region2: #{sage_node_clf_forward.1} parent=1 // pred_check
      _
    $region3: #{sage_node_clf_forward.1} parent=1 // pred_check_branch
      %12 = sbr.rel (0) target = $region5
    $region4: #{sage_node_clf_forward.1} parent=1 // pred_region
      _
    $region5: #{sage_node_clf_forward.1} parent=1 // pred_fallthru
      _
    // Predicated region
    $region6: #{sage_node_clf_forward.1} parent=1 // pred_check
      _
    $region7: #{sage_node_clf_forward.1} parent=1 // pred_check_branch
      %14 = sbr.rel (0) target = $region9
    $region8: #{sage_node_clf_forward.1} parent=1 // pred_region
      _
    $region9: #{sage_node_clf_forward.1} parent=1 // pred_fallthru
      _
    // Predicated region
    $region10: #{sage_node_clf_forward.1} parent=1 // pred_check
      _
    $region11: #{sage_node_clf_forward.1} parent=1 // pred_check_branch
      %16 = sbr.rel (0) target = $region13
    $region12: #{sage_node_clf_forward.1} parent=1 // pred_region
      %18 = vsyncadd [#allocation3], 0
      %s19 = sshll.u32 %s2, 4
      %s20 = int_to_ptr.hbm [resolvable:$true] %s19
      %s21 = sshll.u32 [#allocation2], 4
      %s22 = int_to_ptr.vmem [resolvable:$true] %s21
      %27 = dma.hbm_to_vmem [thread:$0]  %s20, 16384, %s22, [#allocation3], 128, 128, 8
    $region13: #{sage_node_clf_forward.1} parent=1 // pred_fallthru
      _
    // Predicated region
    $region14: #{sage_node_clf_forward.1} parent=1 // pred_check
      _
    $region15: #{sage_node_clf_forward.1} parent=1 // pred_check_branch
      %29 = sbr.rel (0) target = $region17
    $region16: #{sage_node_clf_forward.1} parent=1 // pred_region
      _
    $region17: #{sage_node_clf_forward.1} parent=1 // pred_fallthru
      _
    // Predicated region
    $region18: #{sage_node_clf_forward.1} parent=1 // pred_check
      _
    $region19: #{sage_node_clf_forward.1} parent=1 // pred_check_branch
      %31 = sbr.rel (0) target = $region21
    $region20: #{sage_node_clf_forward.1} parent=1 // pred_region
      %33 = dma.done [#allocation3], 16384
    $region21: #{sage_node_clf_forward.1} parent=1 // pred_fallthru
      _
    %v34 = vld [vmem:[%s0] sm:$0xff]
    %v35 = vld [vmem:[%s0 + $0x8] sm:$0xff]
    %v36 = vld [vmem:[%s0 + $0x10] sm:$0xff]
    %v37 = vld [vmem:[%s0 + $0x18] sm:$0xff]
    %v38 = vld [vmem:[%s0 + $0x20] sm:$0xff]
    %v39 = vld [vmem:[%s0 + $0x28] sm:$0xff]
    %v40 = vld [vmem:[%s0 + $0x30] sm:$0xff]
    %v41 = vld [vmem:[%s0 + $0x38] sm:$0xff]
    %v42 = vld [vmem:[#allocation2] sm:$0xff]
    %v43 = vld [vmem:[#allocation2 + $0x8] sm:$0xff]
    %v44 = vld [vmem:[%s3] sm:$0x1]
    %v46 = vperm.slane %v44, 0
    %vm48 = vcmask 130048
    %v50 = vsel %vm48, %v34, 0
    %v53 = vsel %vm48, %v35, 0
    %v56 = vsel %vm48, %v36, 0
    %v59 = vsel %vm48, %v37, 0
    %v62 = vsel %vm48, %v38, 0
    %v65 = vsel %vm48, %v39, 0
    %v68 = vsel %vm48, %v40, 0
    %v71 = vsel %vm48, %v41, 0
    %73 = vmatpush.msra.mxu0 0.0
    %74 = vmatpush.msra.mxu0 0.0
    %75 = vmatpush.msra.mxu0 0.0
    %76 = vmatpush.msra.mxu0 0.0
    %77 = vmatpush.msra.mxu0 0.0
    %78 = vmatpush.msra.mxu0 0.0
    %79 = vmatpush.msra.mxu0 0.0
    %80 = vmatpush.msra.mxu0 0.0
    %81 = vmatpush.msra.mxu0 0.0
    %82 = vmatpush.msra.mxu0 0.0
    %83 = vmatpush.msra.mxu0 0.0
    %84 = vmatpush.msra.mxu0 0.0
    %85 = vmatpush.msra.mxu0 0.0
    %86 = vmatpush.msra.mxu0 0.0
    %87 = vmatpush.msra.mxu0 %v43
    %88 = vmatpush.msra.mxu0 %v42
    %89 = vmatmul.f32.gmra.mxu0 %v50
    %v90 = vpop.f32.mrf.mxu0
    %v91 = vadd.f32 %v46, %v90
    %92 = vmatmul.f32.gmra.mxu0 %v53
    %v93 = vpop.f32.mrf.mxu0
    %v94 = vadd.f32 %v46, %v93
    %95 = vmatmul.f32.gmra.mxu0 %v56
    %v96 = vpop.f32.mrf.mxu0
    %v97 = vadd.f32 %v46, %v96
    %98 = vmatmul.f32.gmra.mxu0 %v59
    %v99 = vpop.f32.mrf.mxu0
    %v100 = vadd.f32 %v46, %v99
    %101 = vmatmul.f32.gmra.mxu0 %v62
    %v102 = vpop.f32.mrf.mxu0
    %v103 = vadd.f32 %v46, %v102
    %104 = vmatmul.f32.gmra.mxu0 %v65
    %v105 = vpop.f32.mrf.mxu0
    %v106 = vadd.f32 %v46, %v105
    %107 = vmatmul.f32.gmra.mxu0 %v68
    %v108 = vpop.f32.mrf.mxu0
    %v109 = vadd.f32 %v46, %v108
    %110 = vmatmul.f32.gmra.mxu0 %v71
    %v111 = vpop.f32.mrf.mxu0
    %v112 = vadd.f32 %v46, %v111
    %113 = vdwg.mxu0
    %v114 = vld [vmem:[%s1] sm:$0xff]
    %v115 = vld [vmem:[%s1 + $0x8] sm:$0xff]
    %v116 = vld [vmem:[%s1 + $0x10] sm:$0xff]
    %v117 = vld [vmem:[%s1 + $0x18] sm:$0xff]
    %v118 = vld [vmem:[%s1 + $0x20] sm:$0xff]
    %v119 = vld [vmem:[%s1 + $0x28] sm:$0xff]
    %v120 = vld [vmem:[%s1 + $0x30] sm:$0xff]
    %v121 = vld [vmem:[%s1 + $0x38] sm:$0xff]
    %vm122 = vcmask 523264
    %v124 = vsel %vm122, %v114, 0
    %v127 = vsel %vm122, %v115, 0
    %v130 = vsel %vm122, %v116, 0
    %v133 = vsel %vm122, %v117, 0
    %v136 = vsel %vm122, %v118, 0
    %v139 = vsel %vm122, %v119, 0
    %v142 = vsel %vm122, %v120, 0
    %v145 = vsel %vm122, %v121, 0
    %147 = vmatpush.msra.mxu0 0.0
    %148 = vmatpush.msra.mxu0 0.0
    %149 = vmatpush.msra.mxu0 0.0
    %150 = vmatpush.msra.mxu0 0.0
    %151 = vmatpush.msra.mxu0 0.0
    %152 = vmatpush.msra.mxu0 0.0
    %153 = vmatpush.msra.mxu0 0.0
    %154 = vmatpush.msra.mxu0 0.0
    %155 = vmatpush.msra.mxu0 %v112
    %156 = vmatpush.msra.mxu0 %v109
    %157 = vmatpush.msra.mxu0 %v106
    %158 = vmatpush.msra.mxu0 %v103
    %159 = vmatpush.msra.mxu0 %v100
    %160 = vmatpush.msra.mxu0 %v97
    %161 = vmatpush.msra.mxu0 %v94
    %162 = vmatpush.msra.mxu0 %v91
    %163 = vmatmul.f32.gmra.mxu0 %v124
    %v164 = vpop.f32.mrf.mxu0
    %v165 = vadd.f32 0.0, %v164
    %166 = vmatmul.f32.gmra.mxu0 %v127
    %v167 = vpop.f32.mrf.mxu0
    %v168 = vadd.f32 0.0, %v167
    %169 = vmatmul.f32.gmra.mxu0 %v130
    %v170 = vpop.f32.mrf.mxu0
    %v171 = vadd.f32 0.0, %v170
    %172 = vmatmul.f32.gmra.mxu0 %v133
    %v173 = vpop.f32.mrf.mxu0
    %v174 = vadd.f32 0.0, %v173
    %175 = vmatmul.f32.gmra.mxu0 %v136
    %v176 = vpop.f32.mrf.mxu0
    %v177 = vadd.f32 0.0, %v176
    %178 = vmatmul.f32.gmra.mxu0 %v139
    %v179 = vpop.f32.mrf.mxu0
    %v180 = vadd.f32 0.0, %v179
    %181 = vmatmul.f32.gmra.mxu0 %v142
    %v182 = vpop.f32.mrf.mxu0
    %v183 = vadd.f32 0.0, %v182
    %184 = vmatmul.f32.gmra.mxu0 %v145
    %v185 = vpop.f32.mrf.mxu0
    %v186 = vadd.f32 0.0, %v185
    %187 = vdwg.mxu0
    %s188 = scalar_lea.vmem [#allocation2], 256
    %v189 = vld [vmem:[%s188] sm:$0xff]
    %v190 = vld [vmem:[%s188 + $0x8] sm:$0xff]
    %v191 = vld [vmem:[%s188 + $0x10] sm:$0xff]
    %v192 = vld [vmem:[%s188 + $0x18] sm:$0xff]
    %v193 = vld [vmem:[%s188 + $0x20] sm:$0xff]
    %v194 = vld [vmem:[%s188 + $0x28] sm:$0xff]
    %v195 = vld [vmem:[%s188 + $0x30] sm:$0xff]
    %v196 = vld [vmem:[%s188 + $0x38] sm:$0xff]
    %v197 = vld [vmem:[%s188 + $0x40] sm:$0xff]
    %v198 = vld [vmem:[%s188 + $0x48] sm:$0xff]
    %v199 = vld [vmem:[%s188 + $0x50] sm:$0xff]
    %v200 = vld [vmem:[%s188 + $0x58] sm:$0xff]
    %v201 = vld [vmem:[%s188 + $0x60] sm:$0xff]
    %v202 = vld [vmem:[%s188 + $0x68] sm:$0xff]
    %v203 = vld [vmem:[%s188 + $0x70] sm:$0xff]
    %v204 = vld [vmem:[%s188 + $0x78] sm:$0xff]
    %v205 = vld [vmem:[%s188 + $0x80] sm:$0xff]
    %v206 = vld [vmem:[%s188 + $0x88] sm:$0xff]
    %v207 = vld [vmem:[%s188 + $0x90] sm:$0xff]
    %v208 = vld [vmem:[%s188 + $0x98] sm:$0xff]
    %v209 = vld [vmem:[%s188 + $0xa0] sm:$0xff]
    %v210 = vld [vmem:[%s188 + $0xa8] sm:$0xff]
    %v211 = vld [vmem:[%s188 + $0xb0] sm:$0xff]
    %v212 = vld [vmem:[%s188 + $0xb8] sm:$0xff]
    %v213 = vld [vmem:[%s188 + $0xc0] sm:$0xff]
    %v214 = vld [vmem:[%s188 + $0xc8] sm:$0xff]
    %v215 = vld [vmem:[%s188 + $0xd0] sm:$0xff]
    %v216 = vld [vmem:[%s188 + $0xd8] sm:$0xff]
    %v217 = vld [vmem:[%s188 + $0xe0] sm:$0xff]
    %v218 = vld [vmem:[%s188 + $0xe8] sm:$0xff]
    %v219 = vld [vmem:[%s188 + $0xf0] sm:$0xff]
    %v220 = vld [vmem:[%s188 + $0xf8] sm:$0xff]
    %s221 = scalar_lea.vmem %s3, 1
    %v222 = vld [vmem:[%s221] sm:$0x1]
    %v224 = vperm.slane %v222, 0
    %226 = vmatpush.msra.mxu0 %v204
    %227 = vmatpush.msra.mxu0 %v203
    %228 = vmatpush.msra.mxu0 %v202
    %229 = vmatpush.msra.mxu0 %v201
    %230 = vmatpush.msra.mxu0 %v200
    %231 = vmatpush.msra.mxu0 %v199
    %232 = vmatpush.msra.mxu0 %v198
    %233 = vmatpush.msra.mxu0 %v197
    %234 = vmatpush.msra.mxu0 %v196
    %235 = vmatpush.msra.mxu0 %v195
    %236 = vmatpush.msra.mxu0 %v194
    %237 = vmatpush.msra.mxu0 %v193
    %238 = vmatpush.msra.mxu0 %v192
    %239 = vmatpush.msra.mxu0 %v191
    %240 = vmatpush.msra.mxu0 %v190
    %241 = vmatpush.msra.mxu0 %v189
    %242 = vmatmul.f32.gmra.mxu0 %v165
    %v243 = vpop.f32.mrf.mxu0
    %v244 = vadd.f32 %v224, %v243
    %245 = vmatmul.f32.gmra.mxu0 %v168
    %v246 = vpop.f32.mrf.mxu0
    %v247 = vadd.f32 %v224, %v246
    %248 = vmatmul.f32.gmra.mxu0 %v171
    %v249 = vpop.f32.mrf.mxu0
    %v250 = vadd.f32 %v224, %v249
    %251 = vmatmul.f32.gmra.mxu0 %v174
    %v252 = vpop.f32.mrf.mxu0
    %v253 = vadd.f32 %v224, %v252
    %254 = vmatmul.f32.gmra.mxu0 %v177
    %v255 = vpop.f32.mrf.mxu0
    %v256 = vadd.f32 %v224, %v255
    %257 = vmatmul.f32.gmra.mxu0 %v180
    %v258 = vpop.f32.mrf.mxu0
    %v259 = vadd.f32 %v224, %v258
    %260 = vmatmul.f32.gmra.mxu0 %v183
    %v261 = vpop.f32.mrf.mxu0
    %v262 = vadd.f32 %v224, %v261
    %263 = vmatmul.f32.gmra.mxu0 %v186
    %v264 = vpop.f32.mrf.mxu0
    %v265 = vadd.f32 %v224, %v264
    %266 = vdwg.mxu0
    %267 = vmatpush.msra.mxu0 %v220
    %268 = vmatpush.msra.mxu0 %v219
    %269 = vmatpush.msra.mxu0 %v218
    %270 = vmatpush.msra.mxu0 %v217
    %271 = vmatpush.msra.mxu0 %v216
    %272 = vmatpush.msra.mxu0 %v215
    %273 = vmatpush.msra.mxu0 %v214
    %274 = vmatpush.msra.mxu0 %v213
    %275 = vmatpush.msra.mxu0 %v212
    %276 = vmatpush.msra.mxu0 %v211
    %277 = vmatpush.msra.mxu0 %v210
    %278 = vmatpush.msra.mxu0 %v209
    %279 = vmatpush.msra.mxu0 %v208
    %280 = vmatpush.msra.mxu0 %v207
    %281 = vmatpush.msra.mxu0 %v206
    %282 = vmatpush.msra.mxu0 %v205
    %283 = vmatmul.f32.gmra.mxu0 %v91
    %v284 = vpop.f32.mrf.mxu0
    %v285 = vadd.f32 %v244, %v284
    %286 = vmatmul.f32.gmra.mxu0 %v94
    %v287 = vpop.f32.mrf.mxu0
    %v288 = vadd.f32 %v247, %v287
    %289 = vmatmul.f32.gmra.mxu0 %v97
    %v290 = vpop.f32.mrf.mxu0
    %v291 = vadd.f32 %v250, %v290
    %292 = vmatmul.f32.gmra.mxu0 %v100
    %v293 = vpop.f32.mrf.mxu0
    %v294 = vadd.f32 %v253, %v293
    %295 = vmatmul.f32.gmra.mxu0 %v103
    %v296 = vpop.f32.mrf.mxu0
    %v297 = vadd.f32 %v256, %v296
    %298 = vmatmul.f32.gmra.mxu0 %v106
    %v299 = vpop.f32.mrf.mxu0
    %v300 = vadd.f32 %v259, %v299
    %301 = vmatmul.f32.gmra.mxu0 %v109
    %v302 = vpop.f32.mrf.mxu0
    %v303 = vadd.f32 %v262, %v302
    %304 = vmatmul.f32.gmra.mxu0 %v112
    %v305 = vpop.f32.mrf.mxu0
    %v306 = vadd.f32 %v265, %v305
    %307 = vdwg.mxu0
    %v308 = vmax.f32 %v285, 0.0
    %v309 = vmax.f32 %v288, 0.0
    %v310 = vmax.f32 %v291, 0.0
    %v311 = vmax.f32 %v294, 0.0
    %v312 = vmax.f32 %v297, 0.0
    %v313 = vmax.f32 %v300, 0.0
    %v314 = vmax.f32 %v303, 0.0
    %v315 = vmax.f32 %v306, 0.0
    %316 = vmatpush.msra.mxu0 0.0
    %317 = vmatpush.msra.mxu0 0.0
    %318 = vmatpush.msra.mxu0 0.0
    %319 = vmatpush.msra.mxu0 0.0
    %320 = vmatpush.msra.mxu0 0.0
    %321 = vmatpush.msra.mxu0 0.0
    %322 = vmatpush.msra.mxu0 0.0
    %323 = vmatpush.msra.mxu0 0.0
    %324 = vmatpush.msra.mxu0 %v315
    %325 = vmatpush.msra.mxu0 %v314
    %326 = vmatpush.msra.mxu0 %v313
    %327 = vmatpush.msra.mxu0 %v312
    %328 = vmatpush.msra.mxu0 %v311
    %329 = vmatpush.msra.mxu0 %v310
    %330 = vmatpush.msra.mxu0 %v309
    %331 = vmatpush.msra.mxu0 %v308
    %332 = vmatmul.f32.gmra.mxu0 %v124
    %v333 = vpop.f32.mrf.mxu0
    %v334 = vadd.f32 0.0, %v333
    %335 = vmatmul.f32.gmra.mxu0 %v127
    %v336 = vpop.f32.mrf.mxu0
    %v337 = vadd.f32 0.0, %v336
    %338 = vmatmul.f32.gmra.mxu0 %v130
    %v339 = vpop.f32.mrf.mxu0
    %v340 = vadd.f32 0.0, %v339
    %341 = vmatmul.f32.gmra.mxu0 %v133
    %v342 = vpop.f32.mrf.mxu0
    %v343 = vadd.f32 0.0, %v342
    %344 = vmatmul.f32.gmra.mxu0 %v136
    %v345 = vpop.f32.mrf.mxu0
    %v346 = vadd.f32 0.0, %v345
    %347 = vmatmul.f32.gmra.mxu0 %v139
    %v348 = vpop.f32.mrf.mxu0
    %v349 = vadd.f32 0.0, %v348
    %350 = vmatmul.f32.gmra.mxu0 %v142
    %v351 = vpop.f32.mrf.mxu0
    %v352 = vadd.f32 0.0, %v351
    %353 = vmatmul.f32.gmra.mxu0 %v145
    %v354 = vpop.f32.mrf.mxu0
    %v355 = vadd.f32 0.0, %v354
    %356 = vdwg.mxu0
    %s357 = scalar_lea.vmem [#allocation2], 512
    %v358 = vld [vmem:[%s357] sm:$0xff]
    %v359 = vld [vmem:[%s357 + $0x8] sm:$0xff]
    %v360 = vld [vmem:[%s357 + $0x10] sm:$0xff]
    %v361 = vld [vmem:[%s357 + $0x18] sm:$0xff]
    %v362 = vld [vmem:[%s357 + $0x20] sm:$0xff]
    %v363 = vld [vmem:[%s357 + $0x28] sm:$0xff]
    %v364 = vld [vmem:[%s357 + $0x30] sm:$0xff]
    %v365 = vld [vmem:[%s357 + $0x38] sm:$0xff]
    %v366 = vld [vmem:[%s357 + $0x40] sm:$0xff]
    %v367 = vld [vmem:[%s357 + $0x48] sm:$0xff]
    %v368 = vld [vmem:[%s357 + $0x50] sm:$0xff]
    %v369 = vld [vmem:[%s357 + $0x58] sm:$0xff]
    %v370 = vld [vmem:[%s357 + $0x60] sm:$0xff]
    %v371 = vld [vmem:[%s357 + $0x68] sm:$0xff]
    %v372 = vld [vmem:[%s357 + $0x70] sm:$0xff]
    %v373 = vld [vmem:[%s357 + $0x78] sm:$0xff]
    %v374 = vld [vmem:[%s357 + $0x80] sm:$0xff]
    %v375 = vld [vmem:[%s357 + $0x88] sm:$0xff]
    %v376 = vld [vmem:[%s357 + $0x90] sm:$0xff]
    %v377 = vld [vmem:[%s357 + $0x98] sm:$0xff]
    %v378 = vld [vmem:[%s357 + $0xa0] sm:$0xff]
    %v379 = vld [vmem:[%s357 + $0xa8] sm:$0xff]
    %v380 = vld [vmem:[%s357 + $0xb0] sm:$0xff]
    %v381 = vld [vmem:[%s357 + $0xb8] sm:$0xff]
    %v382 = vld [vmem:[%s357 + $0xc0] sm:$0xff]
    %v383 = vld [vmem:[%s357 + $0xc8] sm:$0xff]
    %v384 = vld [vmem:[%s357 + $0xd0] sm:$0xff]
    %v385 = vld [vmem:[%s357 + $0xd8] sm:$0xff]
    %v386 = vld [vmem:[%s357 + $0xe0] sm:$0xff]
    %v387 = vld [vmem:[%s357 + $0xe8] sm:$0xff]
    %v388 = vld [vmem:[%s357 + $0xf0] sm:$0xff]
    %v389 = vld [vmem:[%s357 + $0xf8] sm:$0xff]
    %s390 = scalar_lea.vmem %s3, 2
    %v391 = vld [vmem:[%s390] sm:$0x1]
    %v393 = vperm.slane %v391, 0
    %395 = vmatpush.msra.mxu0 %v373
    %396 = vmatpush.msra.mxu0 %v372
    %397 = vmatpush.msra.mxu0 %v371
    %398 = vmatpush.msra.mxu0 %v370
    %399 = vmatpush.msra.mxu0 %v369
    %400 = vmatpush.msra.mxu0 %v368
    %401 = vmatpush.msra.mxu0 %v367
    %402 = vmatpush.msra.mxu0 %v366
    %403 = vmatpush.msra.mxu0 %v365
    %404 = vmatpush.msra.mxu0 %v364
    %405 = vmatpush.msra.mxu0 %v363
    %406 = vmatpush.msra.mxu0 %v362
    %407 = vmatpush.msra.mxu0 %v361
    %408 = vmatpush.msra.mxu0 %v360
    %409 = vmatpush.msra.mxu0 %v359
    %410 = vmatpush.msra.mxu0 %v358
    %411 = vmatmul.f32.gmra.mxu0 %v334
    %v412 = vpop.f32.mrf.mxu0
    %v413 = vadd.f32 %v393, %v412
    %414 = vmatmul.f32.gmra.mxu0 %v337
    %v415 = vpop.f32.mrf.mxu0
    %v416 = vadd.f32 %v393, %v415
    %417 = vmatmul.f32.gmra.mxu0 %v340
    %v418 = vpop.f32.mrf.mxu0
    %v419 = vadd.f32 %v393, %v418
    %420 = vmatmul.f32.gmra.mxu0 %v343
    %v421 = vpop.f32.mrf.mxu0
    %v422 = vadd.f32 %v393, %v421
    %423 = vmatmul.f32.gmra.mxu0 %v346
    %v424 = vpop.f32.mrf.mxu0
    %v425 = vadd.f32 %v393, %v424
    %426 = vmatmul.f32.gmra.mxu0 %v349
    %v427 = vpop.f32.mrf.mxu0
    %v428 = vadd.f32 %v393, %v427
    %429 = vmatmul.f32.gmra.mxu0 %v352
    %v430 = vpop.f32.mrf.mxu0
    %v431 = vadd.f32 %v393, %v430
    %432 = vmatmul.f32.gmra.mxu0 %v355
    %v433 = vpop.f32.mrf.mxu0
    %v434 = vadd.f32 %v393, %v433
    %435 = vdwg.mxu0
    %436 = vmatpush.msra.mxu0 %v389
    %437 = vmatpush.msra.mxu0 %v388
    %438 = vmatpush.msra.mxu0 %v387
    %439 = vmatpush.msra.mxu0 %v386
    %440 = vmatpush.msra.mxu0 %v385
    %441 = vmatpush.msra.mxu0 %v384
    %442 = vmatpush.msra.mxu0 %v383
    %443 = vmatpush.msra.mxu0 %v382
    %444 = vmatpush.msra.mxu0 %v381
    %445 = vmatpush.msra.mxu0 %v380
    %446 = vmatpush.msra.mxu0 %v379
    %447 = vmatpush.msra.mxu0 %v378
    %448 = vmatpush.msra.mxu0 %v377
    %449 = vmatpush.msra.mxu0 %v376
    %450 = vmatpush.msra.mxu0 %v375
    %451 = vmatpush.msra.mxu0 %v374
    %452 = vmatmul.f32.gmra.mxu0 %v308
    %v453 = vpop.f32.mrf.mxu0
    %v454 = vadd.f32 %v413, %v453
    %455 = vmatmul.f32.gmra.mxu0 %v309
    %v456 = vpop.f32.mrf.mxu0
    %v457 = vadd.f32 %v416, %v456
    %458 = vmatmul.f32.gmra.mxu0 %v310
    %v459 = vpop.f32.mrf.mxu0
    %v460 = vadd.f32 %v419, %v459
    %461 = vmatmul.f32.gmra.mxu0 %v311
    %v462 = vpop.f32.mrf.mxu0
    %v463 = vadd.f32 %v422, %v462
    %464 = vmatmul.f32.gmra.mxu0 %v312
    %v465 = vpop.f32.mrf.mxu0
    %v466 = vadd.f32 %v425, %v465
    %467 = vmatmul.f32.gmra.mxu0 %v313
    %v468 = vpop.f32.mrf.mxu0
    %v469 = vadd.f32 %v428, %v468
    %470 = vmatmul.f32.gmra.mxu0 %v314
    %v471 = vpop.f32.mrf.mxu0
    %v472 = vadd.f32 %v431, %v471
    %473 = vmatmul.f32.gmra.mxu0 %v315
    %v474 = vpop.f32.mrf.mxu0
    %v475 = vadd.f32 %v434, %v474
    %476 = vdwg.mxu0
    %v477 = vmax.f32 %v454, 0.0
    %v478 = vmax.f32 %v457, 0.0
    %v479 = vmax.f32 %v460, 0.0
    %v480 = vmax.f32 %v463, 0.0
    %v481 = vmax.f32 %v466, 0.0
    %v482 = vmax.f32 %v469, 0.0
    %v483 = vmax.f32 %v472, 0.0
    %v484 = vmax.f32 %v475, 0.0
    %s485 = scalar_lea.vmem [#allocation2], 768
    %v486 = vld [vmem:[%s485] sm:$0xff]
    %v487 = vld [vmem:[%s485 + $0x8] sm:$0xff]
    %v488 = vld [vmem:[%s485 + $0x10] sm:$0xff]
    %v489 = vld [vmem:[%s485 + $0x18] sm:$0xff]
    %v490 = vld [vmem:[%s485 + $0x20] sm:$0xff]
    %v491 = vld [vmem:[%s485 + $0x28] sm:$0xff]
    %v492 = vld [vmem:[%s485 + $0x30] sm:$0xff]
    %v493 = vld [vmem:[%s485 + $0x38] sm:$0xff]
    %v494 = vld [vmem:[%s485 + $0x40] sm:$0xff]
    %v495 = vld [vmem:[%s485 + $0x48] sm:$0xff]
    %v496 = vld [vmem:[%s485 + $0x50] sm:$0xff]
    %v497 = vld [vmem:[%s485 + $0x58] sm:$0xff]
    %v498 = vld [vmem:[%s485 + $0x60] sm:$0xff]
    %v499 = vld [vmem:[%s485 + $0x68] sm:$0xff]
    %v500 = vld [vmem:[%s485 + $0x70] sm:$0xff]
    %v501 = vld [vmem:[%s485 + $0x78] sm:$0xff]
    %s502 = scalar_lea.vmem %s3, 3
    %v503 = vld [vmem:[%s502] sm:$0x1]
    %v505 = vperm.slane %v503, 0
    %507 = vmatpush.msra.mxu0 %v501
    %508 = vmatpush.msra.mxu0 %v500
    %509 = vmatpush.msra.mxu0 %v499
    %510 = vmatpush.msra.mxu0 %v498
    %511 = vmatpush.msra.mxu0 %v497
    %512 = vmatpush.msra.mxu0 %v496
    %513 = vmatpush.msra.mxu0 %v495
    %514 = vmatpush.msra.mxu0 %v494
    %515 = vmatpush.msra.mxu0 %v493
    %516 = vmatpush.msra.mxu0 %v492
    %517 = vmatpush.msra.mxu0 %v491
    %518 = vmatpush.msra.mxu0 %v490
    %519 = vmatpush.msra.mxu0 %v489
    %520 = vmatpush.msra.mxu0 %v488
    %521 = vmatpush.msra.mxu0 %v487
    %522 = vmatpush.msra.mxu0 %v486
    %523 = vmatmul.f32.gmra.mxu0 %v477
    %v524 = vpop.f32.mrf.mxu0
    %v525 = vadd.f32 %v505, %v524
    %526 = vmatmul.f32.gmra.mxu0 %v478
    %v527 = vpop.f32.mrf.mxu0
    %v528 = vadd.f32 %v505, %v527
    %529 = vmatmul.f32.gmra.mxu0 %v479
    %v530 = vpop.f32.mrf.mxu0
    %v531 = vadd.f32 %v505, %v530
    %532 = vmatmul.f32.gmra.mxu0 %v480
    %v533 = vpop.f32.mrf.mxu0
    %v534 = vadd.f32 %v505, %v533
    %535 = vmatmul.f32.gmra.mxu0 %v481
    %v536 = vpop.f32.mrf.mxu0
    %v537 = vadd.f32 %v505, %v536
    %538 = vmatmul.f32.gmra.mxu0 %v482
    %v539 = vpop.f32.mrf.mxu0
    %v540 = vadd.f32 %v505, %v539
    %541 = vmatmul.f32.gmra.mxu0 %v483
    %v542 = vpop.f32.mrf.mxu0
    %v543 = vadd.f32 %v505, %v542
    %544 = vmatmul.f32.gmra.mxu0 %v484
    %v545 = vpop.f32.mrf.mxu0
    %v546 = vadd.f32 %v505, %v545
    %547 = vdwg.mxu0
    %548 = vmax.xlane.f32.xlu0 %v525
    %v549 = vpop.xlane.xlu0 %548
    %550 = vmax.xlane.f32.xlu0 %v528
    %v551 = vpop.xlane.xlu0 %550
    %552 = vmax.xlane.f32.xlu0 %v531
    %v553 = vpop.xlane.xlu0 %552
    %554 = vmax.xlane.f32.xlu0 %v534
    %v555 = vpop.xlane.xlu0 %554
    %556 = vmax.xlane.f32.xlu0 %v537
    %v557 = vpop.xlane.xlu0 %556
    %558 = vmax.xlane.f32.xlu0 %v540
    %v559 = vpop.xlane.xlu0 %558
    %560 = vmax.xlane.f32.xlu0 %v543
    %v561 = vpop.xlane.xlu0 %560
    %562 = vmax.xlane.f32.xlu0 %v546
    %v563 = vpop.xlane.xlu0 %562
    %v564 = vsub.f32 %v525, %v549
    %v565 = vsub.f32 %v528, %v551
    %v566 = vsub.f32 %v531, %v553
    %v567 = vsub.f32 %v534, %v555
    %v568 = vsub.f32 %v537, %v557
    %v569 = vsub.f32 %v540, %v559
    %v570 = vsub.f32 %v543, %v561
    %v571 = vsub.f32 %v546, %v563
    %v572 = vmul.f32 %v564, 1.442695
    %v573 = vpow.pop %v572
    %v574 = vmul.f32 %v565, 1.442695
    %v575 = vpow.pop %v574
    %v576 = vmul.f32 %v566, 1.442695
    %v577 = vpow.pop %v576
    %v578 = vmul.f32 %v567, 1.442695
    %v579 = vpow.pop %v578
    %v580 = vmul.f32 %v568, 1.442695
    %v581 = vpow.pop %v580
    %v582 = vmul.f32 %v569, 1.442695
    %v583 = vpow.pop %v582
    %v584 = vmul.f32 %v570, 1.442695
    %v585 = vpow.pop %v584
    %v586 = vmul.f32 %v571, 1.442695
    %v587 = vpow.pop %v586
    %588 = vadd.xlane.f32.xlu0 %v573
    %v589 = vpop.xlane.xlu0 %588
    %590 = vadd.xlane.f32.xlu0 %v575
    %v591 = vpop.xlane.xlu0 %590
    %592 = vadd.xlane.f32.xlu0 %v577
    %v593 = vpop.xlane.xlu0 %592
    %594 = vadd.xlane.f32.xlu0 %v579
    %v595 = vpop.xlane.xlu0 %594
    %596 = vadd.xlane.f32.xlu0 %v581
    %v597 = vpop.xlane.xlu0 %596
    %598 = vadd.xlane.f32.xlu0 %v583
    %v599 = vpop.xlane.xlu0 %598
    %600 = vadd.xlane.f32.xlu0 %v585
    %v601 = vpop.xlane.xlu0 %600
    %602 = vadd.xlane.f32.xlu0 %v587
    %v603 = vpop.xlane.xlu0 %602
    %v604 = vlog2.pop %v589
    %v605 = vmul.f32 %v604, 0.6931472
    %v606 = vlog2.pop %v591
    %v607 = vmul.f32 %v606, 0.6931472
    %v608 = vlog2.pop %v593
    %v609 = vmul.f32 %v608, 0.6931472
    %v610 = vlog2.pop %v595
    %v611 = vmul.f32 %v610, 0.6931472
    %v612 = vlog2.pop %v597
    %v613 = vmul.f32 %v612, 0.6931472
    %v614 = vlog2.pop %v599
    %v615 = vmul.f32 %v614, 0.6931472
    %v616 = vlog2.pop %v601
    %v617 = vmul.f32 %v616, 0.6931472
    %v618 = vlog2.pop %v603
    %v619 = vmul.f32 %v618, 0.6931472
    %v620 = vsub.f32 %v564, %v605
    %v621 = vsub.f32 %v565, %v607
    %v622 = vsub.f32 %v566, %v609
    %v623 = vsub.f32 %v567, %v611
    %v624 = vsub.f32 %v568, %v613
    %v625 = vsub.f32 %v569, %v615
    %v626 = vsub.f32 %v570, %v617
    %v627 = vsub.f32 %v571, %v619
    %628 = vst [vmem:[#allocation5] sm:$0xff] %v620
    %629 = vst [vmem:[#allocation5 + $0x8] sm:$0xff] %v621
    %630 = vst [vmem:[#allocation5 + $0x10] sm:$0xff] %v622
    %631 = vst [vmem:[#allocation5 + $0x18] sm:$0xff] %v623
    %632 = vst [vmem:[#allocation5 + $0x20] sm:$0xff] %v624
    %633 = vst [vmem:[#allocation5 + $0x28] sm:$0xff] %v625
    %634 = vst [vmem:[#allocation5 + $0x30] sm:$0xff] %v626
    %635 = vst [vmem:[#allocation5 + $0x38] sm:$0xff] %v627
    // Predicated region
    $region22: #{sage_node_clf_forward.1} parent=1 // pred_check
      _
    $region23: #{sage_node_clf_forward.1} parent=1 // pred_check_branch
      %637 = sbr.rel (0) target = $region25
    $region24: #{sage_node_clf_forward.1} parent=1 // pred_region
      %639 = vsyncadd [#allocation4], 0
      %s640 = sshll.u32 [#allocation5], 4
      %s641 = int_to_ptr.vmem [resolvable:$true] %s640
      %s642 = sshll.u32 %s4, 4
      %s643 = int_to_ptr.hbm [resolvable:$true] %s642
      %648 = dma.vmem_to_hbm [thread:$0]  %s641, 1024, %s643, [#allocation4], 128, 128, 8
    $region25: #{sage_node_clf_forward.1} parent=1 // pred_fallthru
      _
    // Predicated region
    $region26: #{sage_node_clf_forward.1} parent=1 // pred_check
      _
    $region27: #{sage_node_clf_forward.1} parent=1 // pred_check_branch
      %650 = sbr.rel (0) target = $region29
    $region28: #{sage_node_clf_forward.1} parent=1 // pred_region
      %652 = dma.done [#allocation4], 1024
    $region29: #{sage_node_clf_forward.1} parent=1 // pred_fallthru
      _
    %653 = vsyncpa [#allocation3], 1
    %654 = vsyncpa [#allocation4], 1

</llo_original>
